<compile_context>
chip_gen: v5e
topology: v5e:2x2
jax: 0.10.0
libtpu: 0.0.40
codegen_flags: <defaults>
</compile_context>

<pallas_src>
import jax
import jax.numpy as jnp
from jax.experimental import pallas as pl
from jax.experimental.pallas import tpu as pltpu


def _soft_thresh_kernel(lambd_ref, u_ref, o_ref):
    # lambd_ref: (1,) float32 in SMEM.  u_ref / o_ref: VMEM tiles.
    lam = lambd_ref[0]
    u = u_ref[...].astype(jnp.float32)
    shrunk = jnp.maximum(u - lam, 0.0) - jnp.maximum(-u - lam, 0.0)
    o_ref[...] = shrunk.astype(o_ref.dtype)


# Per-input-tile VMEM byte budget (in + out, double-buffered => ~4x this).
_TILE_BYTE_BUDGET = 4 * 1024 * 1024


def soft_thresholding(u, lambd):
    """Elementwise soft thresholding of `u` by scalar `lambd` (shape (1,))."""
    orig_shape = u.shape
    orig_dtype = u.dtype
    n = u.size
    itemsize = jnp.dtype(orig_dtype).itemsize

    # ---- choose a lane-dense slab layout (no copies when n % 128 == 0) ----
    width = 128
    for cand in (4096, 2048, 1024, 512, 256, 128):
        if n % cand == 0:
            width = cand
            break

    flat = u.reshape(-1)
    pad = (-n) % width          # only nonzero when n is not a multiple of 128
    if pad:
        flat = jnp.pad(flat, (0, pad))   # soft_thresh(0) == 0, so padding is benign
    rows = (n + pad) // width
    slab = flat.reshape(rows, width)

    # ---- pick tile size: one block for small inputs, budgeted tiles otherwise ----
    max_rows_by_budget = max(16, _TILE_BYTE_BUDGET // (width * itemsize))
    if rows <= max_rows_by_budget:
        tile_rows = rows                 # single full-array block, grid of 1
    else:
        tile_rows = (max_rows_by_budget // 16) * 16   # multiple of 16 (bf16-friendly)
        row_pad = (-rows) % tile_rows
        if row_pad:
            slab = jnp.pad(slab, ((0, row_pad), (0, 0)))
            rows += row_pad

    grid = (rows // tile_rows,)
    tile_bytes = tile_rows * width * itemsize
    # in + out, double buffered, plus margin; capped so it fits v7x's smaller VMEM.
    vmem_limit = min(32 << 20, max(4 * tile_bytes + (2 << 20), 4 << 20))

    out = pl.pallas_call(
        _soft_thresh_kernel,
        out_shape=jax.ShapeDtypeStruct((rows, width), orig_dtype),
        grid_spec=pltpu.PrefetchScalarGridSpec(
            num_scalar_prefetch=0,
            grid=grid,
            in_specs=[
                pl.BlockSpec(memory_space=pltpu.MemorySpace.SMEM),   # lambd (f32 scalar)
                pl.BlockSpec((tile_rows, width), lambda i: (i, 0)),  # u tile
            ],
            out_specs=pl.BlockSpec((tile_rows, width), lambda i: (i, 0)),
        ),
        compiler_params=pltpu.CompilerParams(
            dimension_semantics=("parallel",),
            vmem_limit_bytes=vmem_limit,
        ),
    )(lambd.astype(jnp.float32), slab)

    if pad or out.size != n:
        out = out.reshape(-1)[:n]
    return out.reshape(orig_shape)


class SoftThresholding:
    """JAX mirror of the PyTorch module: lambd initialized to ones(1)."""

    def __init__(self):
        self.lambd = jnp.ones((1,), dtype=jnp.float32)  # deterministic init

    def __call__(self, u):
        return soft_thresholding(u, self.lambd)


if __name__ == "__main__":
    key = jax.random.PRNGKey(0)
    # Small NCHW-shaped input consistent with a conv-style pipeline.
    x = jax.random.normal(key, (2, 4, 16, 16), dtype=jnp.float32) * 2.0

    module = SoftThresholding()
    y = module(x)
    y = jax.block_until_ready(y)

    # Reference check in plain JAX (lambd >= 0, so both formulations agree).
    ref = jnp.sign(x) * jnp.maximum(jnp.abs(x) - module.lambd[0], 0.0)
    assert y.shape == x.shape and y.dtype == x.dtype
    assert jnp.allclose(y, ref, atol=1e-6), "mismatch vs reference"

    print("KERNEL_OK")
</pallas_src>

<mosaic_0001>
module attributes {stable_mosaic.version = 11 : i64} {
  func.func @_soft_thresh_kernel(%arg0: i32, %arg1: memref<1xf32, #tpu.memory_space<smem>>, %arg2: memref<1x2048xf32, #tpu.memory_space<vmem>>, %arg3: memref<1x2048xf32, #tpu.memory_space<vmem>>) attributes {dimension_semantics = [#tpu.dimension_semantics<parallel>], iteration_bounds = array<i64: 1>, scalar_prefetch = 0 : i64, scratch_operands = 0 : i64, tpu.core_type = #tpu.core_type<tc>, window_params = [{transform_indices = @transform_0, window_bounds = array<i64: 1>}, {transform_indices = @transform_1, window_bounds = array<i64: 1, 2048>}, {transform_indices = @transform_2, window_bounds = array<i64: 1, 2048>}]} {
    %c0 = arith.constant 0 : index
    %0 = memref.load %arg1[%c0] : memref<1xf32, #tpu.memory_space<smem>>
    %c0_0 = arith.constant 0 : index
    %c0_1 = arith.constant 0 : index
    %1 = vector.load %arg2[%c0_0, %c0_1] : memref<1x2048xf32, #tpu.memory_space<vmem>>, vector<1x2048xf32>
    %2 = vector.broadcast %0 : f32 to vector<1x2048xf32>
    %3 = arith.subf %1, %2 : vector<1x2048xf32>
    %cst = arith.constant 0.000000e+00 : f32
    %4 = vector.broadcast %cst : f32 to vector<1x2048xf32>
    %5 = arith.maximumf %3, %4 : vector<1x2048xf32>
    %cst_2 = arith.constant 0.000000e+00 : f32
    %6 = vector.broadcast %cst_2 : f32 to vector<1x2048xf32>
    %7 = arith.subf %6, %1 : vector<1x2048xf32>
    %8 = vector.broadcast %0 : f32 to vector<1x2048xf32>
    %9 = arith.subf %7, %8 : vector<1x2048xf32>
    %cst_3 = arith.constant 0.000000e+00 : f32
    %10 = vector.broadcast %cst_3 : f32 to vector<1x2048xf32>
    %11 = arith.maximumf %9, %10 : vector<1x2048xf32>
    %12 = arith.subf %5, %11 : vector<1x2048xf32>
    %c0_4 = arith.constant 0 : index
    %c0_5 = arith.constant 0 : index
    %13 = vector.load %arg3[%c0_4, %c0_5] : memref<1x2048xf32, #tpu.memory_space<vmem>>, vector<1x2048xf32>
    tpu.vector_store %arg3[%c0_4, %c0_5], %12 {strides = array<i32>} : memref<1x2048xf32, #tpu.memory_space<vmem>>, vector<1x2048xf32>,
    return
  }
  func.func @transform_0(%arg0: i32) -> i32 {
    %c0_i32 = arith.constant 0 : i32
    %c0_i32_0 = arith.constant 0 : i32
    return %c0_i32 : i32
  }
  func.func @transform_1(%arg0: i32) -> (i32, i32) {
    %c0_i32 = arith.constant 0 : i32
    %c0_i32_0 = arith.constant 0 : i32
    return %arg0, %c0_i32 : i32, i32
  }
  func.func @transform_2(%arg0: i32) -> (i32, i32) {
    %c0_i32 = arith.constant 0 : i32
    %c0_i32_0 = arith.constant 0 : i32
    return %arg0, %c0_i32 : i32, i32
  }
}

</mosaic_0001>

<llo_original>
// kernel: tpu_custom_call.1
$region0: #{tpu_custom_call.1}
  #allocation0 [shape = 'u32[]', space=smem, size = 0x4, offset = 0x4, fixed_abs, tag = 'smem constant byte address 0x4 - core index']
  #allocation1 [shape = 'u32[72,128]{1,0:T(1,128)}', space=vmem, size = 0x9000, scoped, tag = 'internal scratch']
  #allocation2 [shape = 'f32[1]{0:T(128)S(6)}', space=smem, size = 0x200, scoped, tag = 'scoped memory for tpu_custom_call.1']
  %s0 = inlined_call_operand.<no memory space> [shape: f32[1], index: 0, kind: input, shape index: {}]
  %s1 = inlined_call_operand.hbm [shape: f32[1,2048], index: 1, kind: input, shape index: {}]
  %s2 = inlined_call_operand.hbm [shape: f32[1,2048], index: 2, kind: output, shape index: {}]
  %s3 = sld [smem:[#allocation0]]
  $region22: #{tpu_custom_call.1} parent=0
    _
  %s5 = ssub.s32 1, %s3
  %s6 = scalar_select 0, %s5, %s3
  %7 = sst [smem:[#allocation2]] %s0
  $region1: #{tpu_custom_call.1} parent=0
    #allocation3 [shape = 'u8[8192]{0}', space=vmem, size = 0x2000, scoped, tag = 'input window, operand 1, single buffered']
    #allocation4 [shape = 's32[1]{0}', space=sflag, size = 0x4, scoped, tag = 'scoped memory for tpu_custom_call.1']
    #allocation5 [shape = 's32[1]{0}', space=sflag, size = 0x4, scoped, tag = 'scoped memory for tpu_custom_call.1']
    #allocation6 [shape = 'u8[8192]{0}', space=vmem, size = 0x2000, scoped, tag = 'output window, operand 0, single buffered']
    %8 = vsyncpa [#allocation4], 0
    %9 = vsyncpa [#allocation5], 0
    // Predicated region
    $region2: #{tpu_custom_call.1} parent=1 // pred_check
      _
    $region3: #{tpu_custom_call.1} parent=1 // pred_check_branch
      %11 = sbr.rel (0) target = $region5
    $region4: #{tpu_custom_call.1} parent=1 // pred_region
      _
    $region5: #{tpu_custom_call.1} parent=1 // pred_fallthru
      _
    // Predicated region
    $region6: #{tpu_custom_call.1} parent=1 // pred_check
      _
    $region7: #{tpu_custom_call.1} parent=1 // pred_check_branch
      %13 = sbr.rel (0) target = $region9
    $region8: #{tpu_custom_call.1} parent=1 // pred_region
      %15 = vsyncadd [#allocation4], 0
      %s17 = sshll.u32 %s1, 4
      %s18 = int_to_ptr.hbm [resolvable:$true] %s17
      %s19 = sshll.u32 [#allocation3], 4
      %s20 = int_to_ptr.vmem [resolvable:$true] %s19
      %22 = dma.hbm_to_vmem [thread:$0]  %s18, 256, %s20, [#allocation4]
    $region9: #{tpu_custom_call.1} parent=1 // pred_fallthru
      _
    // Predicated region
    $region10: #{tpu_custom_call.1} parent=1 // pred_check
      _
    $region11: #{tpu_custom_call.1} parent=1 // pred_check_branch
      %24 = sbr.rel (0) target = $region13
    $region12: #{tpu_custom_call.1} parent=1 // pred_region
      %26 = dma.done [#allocation4], 256
    $region13: #{tpu_custom_call.1} parent=1 // pred_fallthru
      _
    %s27 = sld [smem:[#allocation2]]
    %v28 = vld [vmem:[#allocation3] sm:$0xff]
    %v29 = vld [vmem:[#allocation3 + $0x8] sm:$0xff]
    %v30 = vstv %s27
    %v31 = vsub.f32 %v28, %v30
    %v32 = vsub.f32 %v29, %v30
    %v33 = vmax.f32 %v31, 0.0
    %v34 = vmax.f32 %v32, 0.0
    %v35 = vsub.f32 0.0, %v28
    %v36 = vsub.f32 0.0, %v29
    %v37 = vsub.f32 %v35, %v30
    %v38 = vsub.f32 %v36, %v30
    %v39 = vmax.f32 %v37, 0.0
    %v40 = vmax.f32 %v38, 0.0
    %v41 = vsub.f32 %v33, %v39
    %v42 = vsub.f32 %v34, %v40
    %43 = vst [vmem:[#allocation6] sm:$0xff] %v41
    %44 = vst [vmem:[#allocation6 + $0x8] sm:$0xff] %v42
    // Predicated region
    $region14: #{tpu_custom_call.1} parent=1 // pred_check
      _
    $region15: #{tpu_custom_call.1} parent=1 // pred_check_branch
      %46 = sbr.rel (0) target = $region17
    $region16: #{tpu_custom_call.1} parent=1 // pred_region
      %48 = vsyncadd [#allocation5], 0
      %s50 = sshll.u32 [#allocation6], 4
      %s51 = int_to_ptr.vmem [resolvable:$true] %s50
      %s52 = sshll.u32 %s2, 4
      %s53 = int_to_ptr.hbm [resolvable:$true] %s52
      %55 = dma.vmem_to_hbm [thread:$0]  %s51, 256, %s53, [#allocation5]
    $region17: #{tpu_custom_call.1} parent=1 // pred_fallthru
      _
    // Predicated region
    $region18: #{tpu_custom_call.1} parent=1 // pred_check
      _
    $region19: #{tpu_custom_call.1} parent=1 // pred_check_branch
      %57 = sbr.rel (0) target = $region21
    $region20: #{tpu_custom_call.1} parent=1 // pred_region
      %59 = dma.done [#allocation5], 256
    $region21: #{tpu_custom_call.1} parent=1 // pred_fallthru
      _
    %60 = vsyncpa [#allocation4], 1
    %61 = vsyncpa [#allocation5], 1

</llo_original>
